<compile_context>
chip_gen: v7x
topology: tpu7x:2x2x1
jax: 0.10.0
libtpu: 0.0.40
codegen_flags: <defaults>
</compile_context>

<pallas_src>
import functools

import jax
import jax.numpy as jnp
import numpy as np
from jax.experimental import pallas as pl
from jax.experimental.pallas import tpu as pltpu

LANE = 128      # TPU lane width  (last dim of a vreg)
SUBLANE = 8     # TPU sublane width (second-to-last dim of a vreg)


def _round_up(x, m):
    return (x + m - 1) // m * m


def _pad_to(a, shape):
    pads = [(0, s - d) for d, s in zip(a.shape, shape)]
    if all(p == (0, 0) for p in pads):
        return a
    return jnp.pad(a, pads)


# ----------------------------------------------------------------------------
# Plain-JAX glue: parameter algebra (tiny tensors)
# ----------------------------------------------------------------------------

def safe_inv(x):
    return jnp.where(x == 0, 0.0, 1.0 / x)


def compute_t(weight, q):
    """t_i = 1 / sum_j | exp(-q_i) * (W W^T)_ij * exp(q_j) |  (0 where the sum is 0)."""
    wwt = jnp.dot(weight, weight.T, precision=jax.lax.Precision.HIGHEST)
    t = jnp.abs(jnp.exp(-q)[:, None] * wwt * jnp.exp(q)[None, :]).sum(axis=1)
    return safe_inv(t)


# ----------------------------------------------------------------------------
# Pallas kernel: fused  x @ Wt  ->  +bias, ReLU  ->  @ W2  ->  + x
#   W2 = -2 * diag(t) @ W  is pre-folded; inner dim may be tiled (reduction axis).
# ----------------------------------------------------------------------------

def _sll_dense_kernel(x_ref, wt_ref, b_ref, w2_ref, out_ref, acc_ref, *, compute_dtype):
    # x_ref  : (TB, FP)       batch tile of the (padded) input
    # wt_ref : (FP, tIP)      W^T tile, compute_dtype
    # b_ref  : (1,  tIP)      bias tile (f32)
    # w2_ref : (tIP, FP)      -2 * diag(t) @ W tile, compute_dtype
    # out_ref: (TB, FP)
    # acc_ref: (TB, FP)       f32 accumulator (persists across the inner-dim axis)
    k = pl.program_id(1)
    x = x_ref[...]

    @pl.when(k == 0)
    def _():
        acc_ref[...] = x.astype(jnp.float32)          # residual term of  out = x - 2(t*res)@W

    h = jnp.dot(x.astype(compute_dtype), wt_ref[...],
                preferred_element_type=jnp.float32)   # (TB, tIP)  MXU, f32 acc
    h = jnp.maximum(h + b_ref[...], 0.0)              # bias + ReLU (VPU)
    acc_ref[...] += jnp.dot(h.astype(compute_dtype), w2_ref[...],
                            preferred_element_type=jnp.float32)   # (TB, FP)  MXU

    @pl.when(k == pl.num_programs(1) - 1)
    def _():
        out_ref[...] = acc_ref[...].astype(out_ref.dtype)


def sll_dense_forward(params, x, *, tile_b=None, tile_ip=None,
                      compute_dtype=jnp.bfloat16):
    """Forward pass of SDPBasedLipschitzDense. x: (B, in_features) -> (B, in_features)."""
    W = params["weight"]                      # (inner, in_features)
    bias = params["bias"]                     # (1, inner)
    q = params["q"]                           # (inner,)
    inner, feat = W.shape
    B = x.shape[0]

    # --- parameter prep (plain JAX; tiny, done in f32) ---
    t = compute_t(W, q)                                        # (inner,)
    W2 = (-2.0 * t)[:, None] * W                                # fold -2 and diag(t)

    # --- pad feature dims to lane multiples (exact: zero padding contributes 0) ---
    FP = _round_up(feat, LANE)
    IP0 = _round_up(inner, LANE)

    itemsize_c = jnp.dtype(compute_dtype).itemsize
    itemsize_x = jnp.dtype(x.dtype).itemsize

    # --- inner-dim tiling: bound each weight slab (v7x VMEM is 64 MiB / TC) ---
    if tile_ip is None:
        max_w_tile_bytes = 4 << 20                              # per weight slab
        if FP * IP0 * itemsize_c <= max_w_tile_bytes:
            tile_ip = IP0
        else:
            tile_ip = (max_w_tile_bytes // (FP * itemsize_c)) // LANE * LANE
    tile_ip = max(LANE, _round_up(min(tile_ip, IP0), LANE))
    IP = _round_up(IP0, tile_ip)
    n_ip = IP // tile_ip

    # --- batch tiling: ~2 MiB of x per step, multiples of 256 rows, capped by batch ---
    B8 = _round_up(B, SUBLANE)
    if tile_b is None:
        tile_b = max(256, (2 << 20) // max(FP * itemsize_x, 1))
        tile_b = min(2048, _round_up(tile_b, 256))
    tile_b = max(SUBLANE, _round_up(min(tile_b, B8), SUBLANE))
    BP = _round_up(B8, tile_b)
    grid = (BP // tile_b, n_ip)

    # --- host-side padding / casting ---
    xp = _pad_to(x, (BP, FP))
    wt_p = _pad_to(W.T, (FP, IP)).astype(compute_dtype)
    w2_p = _pad_to(W2, (IP, FP)).astype(compute_dtype)
    b_p = _pad_to(bias.astype(jnp.float32), (1, IP))

    # Weight / bias specs: single-buffered when grid-invariant (n_ip == 1),
    # double-buffered (default) when the inner dim is tiled so DMA pipelines.
    invariant = n_ip == 1

    def w_spec(shape, index_map):
        if invariant:
            return pl.BlockSpec(shape, index_map, pipeline_mode=pl.Buffered(1))
        return pl.BlockSpec(shape, index_map)

    in_specs = [
        pl.BlockSpec((tile_b, FP), lambda i, k: (i, 0)),        # x tile (resident over k)
        w_spec((FP, tile_ip), lambda i, k: (0, k)),             # W^T tile
        w_spec((1, tile_ip), lambda i, k: (0, k)),              # bias tile
        w_spec((tile_ip, FP), lambda i, k: (k, 0)),             # -2*diag(t)@W tile
    ]
    out_specs = pl.BlockSpec((tile_b, FP), lambda i, k: (i, 0))
    scratch_shapes = [pltpu.VMEM((tile_b, FP), jnp.float32)]    # f32 accumulator

    # --- explicit scoped-VMEM budget (defaults are 16/32 MiB, far below physical) ---
    n_wbuf = 1 if invariant else 2
    vmem_bytes = (
        2 * tile_b * FP * itemsize_x                # x (double-buffered)
        + 2 * tile_b * FP * itemsize_x              # out (double-buffered)
        + n_wbuf * FP * tile_ip * itemsize_c        # W^T tile(s)
        + n_wbuf * tile_ip * FP * itemsize_c        # W2 tile(s)
        + n_wbuf * SUBLANE * tile_ip * 4            # bias tile(s) (sublane-padded)
        + tile_b * FP * 4                           # accumulator scratch
    )
    vmem_limit = int(vmem_bytes * 1.4) + (2 << 20)
    vmem_limit = max(16 << 20, min(vmem_limit, 64 << 20))

    kern = functools.partial(_sll_dense_kernel, compute_dtype=compute_dtype)
    out_p = pl.pallas_call(
        kern,
        out_shape=jax.ShapeDtypeStruct((BP, FP), x.dtype),
        grid=grid,
        in_specs=in_specs,
        out_specs=out_specs,
        scratch_shapes=scratch_shapes,
        compiler_params=pltpu.CompilerParams(
            dimension_semantics=("parallel", "arbitrary"),      # batch tiles x inner tiles
            vmem_limit_bytes=vmem_limit,
        ),
    )(xp, wt_p, b_p, w2_p)

    if BP != B or FP != feat:
        out_p = out_p[:B, :feat]
    return out_p


# ----------------------------------------------------------------------------
# Pure-JAX reference (mirrors the PyTorch forward exactly)
# ----------------------------------------------------------------------------

def sll_dense_reference(params, x):
    W, bias, q = params["weight"], params["bias"], params["q"]
    t = compute_t(W, q)
    res = x @ W.T + bias
    res = t * jnp.maximum(res, 0.0)
    res = 2.0 * (res @ W)
    return x - res


# ----------------------------------------------------------------------------
# Parameter init (matches nn.Module.__init__: xavier_normal_ weight, uniform bias)
# ----------------------------------------------------------------------------

def init_params(key, in_features, out_features, inner_dim):
    # NOTE: out_features is accepted for API fidelity but (as in the PyTorch module's
    # forward) is unused — the output has in_features columns.
    inner_dim = inner_dim if inner_dim != -1 else in_features
    k1, k2, k3 = jax.random.split(key, 3)
    std = (2.0 / (in_features + inner_dim)) ** 0.5             # xavier_normal_
    W = std * jax.random.normal(k1, (inner_dim, in_features), jnp.float32)
    bound = 1.0 / (in_features ** 0.5)
    b = jax.random.uniform(k2, (1, inner_dim), jnp.float32, minval=-bound, maxval=bound)
    q = jax.random.normal(k3, (inner_dim,), jnp.float32)
    return dict(weight=W, bias=b, q=q)


if __name__ == "__main__":
    key = jax.random.PRNGKey(0)
    pkey, xkey, xkey2 = jax.random.split(key, 3)

    # --- Case 1: small layer, single inner tile (resident weights, Buffered(1) path),
    #             f32 operands, checked tightly against the reference. ---
    B, in_features, out_features, inner_dim = 16, 32, 32, 64
    params = init_params(pkey, in_features, out_features, inner_dim)
    x = jax.random.normal(xkey, (B, in_features), jnp.float32)

    fwd_f32 = jax.jit(functools.partial(sll_dense_forward, params,
                                        compute_dtype=jnp.float32))
    out = jax.block_until_ready(fwd_f32(x))
    ref = sll_dense_reference(params, x)
    assert out.shape == (B, in_features), out.shape
    np.testing.assert_allclose(np.asarray(out), np.asarray(ref), rtol=1e-4, atol=1e-4)

    # --- Case 2: default bf16-operand MXU path (f32 accumulation), validated against
    #             the f32 reference with a bf16-appropriate tolerance. ---
    fwd_bf16 = jax.jit(functools.partial(sll_dense_forward, params,
                                         compute_dtype=jnp.bfloat16))
    out_bf16 = jax.block_until_ready(fwd_bf16(x))
    assert out_bf16.shape == (B, in_features)
    np.testing.assert_allclose(np.asarray(out_bf16), np.asarray(ref),
                               rtol=5e-2, atol=5e-2)

    # --- Case 3: force inner-dim tiling (reduction grid axis + accumulator path). ---
    params3 = init_params(jax.random.PRNGKey(1), 48, 48, 200)   # inner pads to 256 -> 2 tiles
    x3 = jax.random.normal(xkey2, (24, 48), jnp.float32)
    fwd_tiled = jax.jit(functools.partial(sll_dense_forward, params3, tile_ip=128,
                                          compute_dtype=jnp.float32))
    out3 = jax.block_until_ready(fwd_tiled(x3))
    ref3 = sll_dense_reference(params3, x3)
    np.testing.assert_allclose(np.asarray(out3), np.asarray(ref3), rtol=1e-4, atol=1e-4)

    print("KERNEL_OK")
</pallas_src>

<mosaic_0001>
module attributes {stable_mosaic.version = 11 : i64} {
  func.func @_sll_dense_kernel(%arg0: i32, %arg1: i32, %arg2: memref<16x128xf32, #tpu.memory_space<vmem>>, %arg3: memref<128x128xf32, #tpu.memory_space<vmem>>, %arg4: memref<1x128xf32, #tpu.memory_space<vmem>>, %arg5: memref<128x128xf32, #tpu.memory_space<vmem>>, %arg6: memref<16x128xf32, #tpu.memory_space<vmem>>, %arg7: memref<16x128xf32, #tpu.memory_space<vmem>>) attributes {dimension_semantics = [#tpu.dimension_semantics<parallel>, #tpu.dimension_semantics<arbitrary>], iteration_bounds = array<i64: 1, 1>, scalar_prefetch = 0 : i64, scratch_operands = 1 : i64, tpu.core_type = #tpu.core_type<tc>, window_params = [{transform_indices = @transform_0, window_bounds = array<i64: 16, 128>}, {pipeline_mode = #tpu.pipeline_mode<synchronous>, transform_indices = @transform_1, window_bounds = array<i64: 128, 128>}, {pipeline_mode = #tpu.pipeline_mode<synchronous>, transform_indices = @transform_2, window_bounds = array<i64: 1, 128>}, {pipeline_mode = #tpu.pipeline_mode<synchronous>, transform_indices = @transform_3, window_bounds = array<i64: 128, 128>}, {transform_indices = @transform_4, window_bounds = array<i64: 16, 128>}]} {
    %c0 = arith.constant 0 : index
    %c0_0 = arith.constant 0 : index
    %0 = vector.load %arg2[%c0, %c0_0] : memref<16x128xf32, #tpu.memory_space<vmem>>, vector<16x128xf32>
    %c0_i32 = arith.constant 0 : i32
    %1 = arith.cmpi eq, %arg1, %c0_i32 : i32
    %2 = arith.extui %1 : i1 to i32
    %c0_i32_1 = arith.constant 0 : i32
    %3 = arith.cmpi ne, %2, %c0_i32_1 : i32
    scf.if %3 {
      %c0_16 = arith.constant 0 : index
      %c0_17 = arith.constant 0 : index
      %19 = vector.load %arg7[%c0_16, %c0_17] : memref<16x128xf32, #tpu.memory_space<vmem>>, vector<16x128xf32>
      tpu.vector_store %arg7[%c0_16, %c0_17], %0 {strides = array<i32>} : memref<16x128xf32, #tpu.memory_space<vmem>>, vector<16x128xf32>,
    } else {
    }
    %c0_2 = arith.constant 0 : index
    %c0_3 = arith.constant 0 : index
    %4 = vector.load %arg3[%c0_2, %c0_3] : memref<128x128xf32, #tpu.memory_space<vmem>>, vector<128x128xf32>
    %cst = arith.constant dense<0.000000e+00> : vector<16x128xf32>
    %5 = tpu.matmul %0, %4, %cst {dimension_numbers = #tpu.dot_dimension_numbers<[1], [0], [0], [1], [0, 0, 1, 1], [], []>} : vector<16x128xf32>, vector<128x128xf32>, vector<16x128xf32> -> vector<16x128xf32>
    %c0_4 = arith.constant 0 : index
    %c0_5 = arith.constant 0 : index
    %6 = vector.load %arg4[%c0_4, %c0_5] : memref<1x128xf32, #tpu.memory_space<vmem>>, vector<1x128xf32>
    %7 = vector.broadcast %6 : vector<1x128xf32> to vector<16x128xf32>
    %8 = arith.addf %5, %7 : vector<16x128xf32>
    %cst_6 = arith.constant 0.000000e+00 : f32
    %9 = vector.broadcast %cst_6 : f32 to vector<16x128xf32>
    %10 = arith.maximumf %8, %9 : vector<16x128xf32>
    %c0_7 = arith.constant 0 : index
    %c0_8 = arith.constant 0 : index
    %11 = vector.load %arg7[%c0_7, %c0_8] : memref<16x128xf32, #tpu.memory_space<vmem>>, vector<16x128xf32>
    %c0_9 = arith.constant 0 : index
    %c0_10 = arith.constant 0 : index
    %12 = vector.load %arg5[%c0_9, %c0_10] : memref<128x128xf32, #tpu.memory_space<vmem>>, vector<128x128xf32>
    %cst_11 = arith.constant dense<0.000000e+00> : vector<16x128xf32>
    %13 = tpu.matmul %10, %12, %cst_11 {dimension_numbers = #tpu.dot_dimension_numbers<[1], [0], [0], [1], [0, 0, 1, 1], [], []>} : vector<16x128xf32>, vector<128x128xf32>, vector<16x128xf32> -> vector<16x128xf32>
    %14 = arith.addf %11, %13 : vector<16x128xf32>
    %c0_12 = arith.constant 0 : index
    %c0_13 = arith.constant 0 : index
    %15 = vector.load %arg7[%c0_12, %c0_13] : memref<16x128xf32, #tpu.memory_space<vmem>>, vector<16x128xf32>
    tpu.vector_store %arg7[%c0_12, %c0_13], %14 {strides = array<i32>} : memref<16x128xf32, #tpu.memory_space<vmem>>, vector<16x128xf32>,
    %c0_i32_14 = arith.constant 0 : i32
    %16 = arith.cmpi eq, %arg1, %c0_i32_14 : i32
    %17 = arith.extui %16 : i1 to i32
    %c0_i32_15 = arith.constant 0 : i32
    %18 = arith.cmpi ne, %17, %c0_i32_15 : i32
    scf.if %18 {
      %c0_16 = arith.constant 0 : index
      %c0_17 = arith.constant 0 : index
      %19 = vector.load %arg7[%c0_16, %c0_17] : memref<16x128xf32, #tpu.memory_space<vmem>>, vector<16x128xf32>
      %c0_18 = arith.constant 0 : index
      %c0_19 = arith.constant 0 : index
      %20 = vector.load %arg6[%c0_18, %c0_19] : memref<16x128xf32, #tpu.memory_space<vmem>>, vector<16x128xf32>
      tpu.vector_store %arg6[%c0_18, %c0_19], %19 {strides = array<i32>} : memref<16x128xf32, #tpu.memory_space<vmem>>, vector<16x128xf32>,
    } else {
    }
    return
  }
  func.func @transform_0(%arg0: i32, %arg1: i32) -> (i32, i32) {
    %c0_i32 = arith.constant 0 : i32
    %c0_i32_0 = arith.constant 0 : i32
    return %arg0, %c0_i32 : i32, i32
  }
  func.func @transform_1(%arg0: i32, %arg1: i32) -> (i32, i32) {
    %c0_i32 = arith.constant 0 : i32
    %c0_i32_0 = arith.constant 0 : i32
    return %c0_i32, %arg1 : i32, i32
  }
  func.func @transform_2(%arg0: i32, %arg1: i32) -> (i32, i32) {
    %c0_i32 = arith.constant 0 : i32
    %c0_i32_0 = arith.constant 0 : i32
    return %c0_i32, %arg1 : i32, i32
  }
  func.func @transform_3(%arg0: i32, %arg1: i32) -> (i32, i32) {
    %c0_i32 = arith.constant 0 : i32
    %c0_i32_0 = arith.constant 0 : i32
    return %arg1, %c0_i32 : i32, i32
  }
  func.func @transform_4(%arg0: i32, %arg1: i32) -> (i32, i32) {
    %c0_i32 = arith.constant 0 : i32
    %c0_i32_0 = arith.constant 0 : i32
    return %arg0, %c0_i32 : i32, i32
  }
}

</mosaic_0001>

<llo_original>
// kernel: sll_dense_forward.1
$region0: #{sll_dense_forward.1}
  #allocation0 [shape = 'u32[]', space=smem, size = 0x4, offset = 0x4, fixed_abs, tag = 'smem constant byte address 0x4 - core index']
  #allocation1 [shape = 'u32[144,128]{1,0:T(1,128)}', space=vmem, size = 0x12000, scoped, tag = 'internal scratch']
  #allocation2 [shape = 'f32[16,128]{1,0:T(8,128)}', space=vmem, size = 0x2000, scoped, tag = 'scratch operand']
  %s0 = inlined_call_operand.vmem [shape: f32[16,128], index: 0, kind: input, shape index: {}]
  %s1 = inlined_call_operand.hbm [shape: f32[128,128], index: 1, kind: input, shape index: {}]
  %s2 = inlined_call_operand.vmem [shape: f32[1,128], index: 2, kind: input, shape index: {}]
  %s3 = inlined_call_operand.hbm [shape: f32[128,128], index: 3, kind: input, shape index: {}]
  %s4 = inlined_call_operand.hbm [shape: f32[16,128], index: 4, kind: output, shape index: {}]
  %s5 = sld [smem:[#allocation0]]
  $region42: #{sll_dense_forward.1} parent=0
    _
  %s7 = ssub.s32 1, %s5
  %s8 = scalar_select 0, %s7, %s5
  $region1: #{sll_dense_forward.1} parent=0
    #allocation3 [shape = 'u8[65536]{0}', space=vmem, size = 0x10000, scoped, tag = 'input window, operand 1, single buffered']
    #allocation4 [shape = 's32[1]{0}', space=sflag, size = 0x4, scoped, tag = 'scoped memory for sll_dense_forward.1']
    #allocation5 [shape = 's32[1]{0}', space=sflag, size = 0x4, scoped, tag = 'scoped memory for sll_dense_forward.1']
    #allocation6 [shape = 'u8[65536]{0}', space=vmem, size = 0x10000, scoped, tag = 'input window, operand 3, single buffered']
    #allocation7 [shape = 's32[1]{0}', space=sflag, size = 0x4, scoped, tag = 'scoped memory for sll_dense_forward.1']
    #allocation8 [shape = 'u8[8192]{0}', space=vmem, size = 0x2000, scoped, tag = 'output window, operand 0, single buffered']
    %9 = vsyncpa [#allocation4], 0
    %10 = vsyncpa [#allocation7], 0
    %11 = vsyncpa [#allocation5], 0
    // Predicated region
    $region2: #{sll_dense_forward.1} parent=1 // pred_check
      _
    $region3: #{sll_dense_forward.1} parent=1 // pred_check_branch
      %13 = sbr.rel (0) target = $region5
    $region4: #{sll_dense_forward.1} parent=1 // pred_region
      _
    $region5: #{sll_dense_forward.1} parent=1 // pred_fallthru
      _
    // Predicated region
    $region6: #{sll_dense_forward.1} parent=1 // pred_check
      _
    $region7: #{sll_dense_forward.1} parent=1 // pred_check_branch
      %15 = sbr.rel (0) target = $region9
    $region8: #{sll_dense_forward.1} parent=1 // pred_region
      %s17 = ssub.s32 2048, 2048
      %18 = vsyncadd [#allocation4], %s17
      %s19 = sshll.u32 [#allocation3], 4
      %s20 = int_to_ptr.vmem [resolvable:$true] %s19
      %25 = dma.hbm_to_vmem [thread:$0]  %s1, 2048, %s20, [#allocation4], 128, 128, 8
    $region9: #{sll_dense_forward.1} parent=1 // pred_fallthru
      _
    // Predicated region
    $region10: #{sll_dense_forward.1} parent=1 // pred_check
      _
    $region11: #{sll_dense_forward.1} parent=1 // pred_check_branch
      %27 = sbr.rel (0) target = $region13
    $region12: #{sll_dense_forward.1} parent=1 // pred_region
      _
    $region13: #{sll_dense_forward.1} parent=1 // pred_fallthru
      _
    // Predicated region
    $region14: #{sll_dense_forward.1} parent=1 // pred_check
      _
    $region15: #{sll_dense_forward.1} parent=1 // pred_check_branch
      %29 = sbr.rel (0) target = $region17
    $region16: #{sll_dense_forward.1} parent=1 // pred_region
      %s31 = ssub.s32 2048, 2048
      %32 = vsyncadd [#allocation7], %s31
      %s33 = sshll.u32 [#allocation6], 4
      %s34 = int_to_ptr.vmem [resolvable:$true] %s33
      %39 = dma.hbm_to_vmem [thread:$0]  %s3, 2048, %s34, [#allocation7], 128, 128, 8
    $region17: #{sll_dense_forward.1} parent=1 // pred_fallthru
      _
    // Predicated region
    $region18: #{sll_dense_forward.1} parent=1 // pred_check
      _
    $region19: #{sll_dense_forward.1} parent=1 // pred_check_branch
      %41 = sbr.rel (0) target = $region21
    $region20: #{sll_dense_forward.1} parent=1 // pred_region
      %42 = dma.done [#allocation4], 2048
    $region21: #{sll_dense_forward.1} parent=1 // pred_fallthru
      _
    // Predicated region
    $region22: #{sll_dense_forward.1} parent=1 // pred_check
      _
    $region23: #{sll_dense_forward.1} parent=1 // pred_check_branch
      %44 = sbr.rel (0) target = $region25
    $region24: #{sll_dense_forward.1} parent=1 // pred_region
      %45 = dma.done [#allocation7], 2048
    $region25: #{sll_dense_forward.1} parent=1 // pred_fallthru
      _
    %v46 = vld [vmem:[%s0] sm:$0xff]
    %v47 = vld [vmem:[%s0 + $0x8] sm:$0xff]
    %p48 = scmp.eq.s32.totalorder 0, 0
    // Predicated region
    $region26: #{sll_dense_forward.1} parent=1 // pred_check
      %p49 = pneg %p48
    $region27: #{sll_dense_forward.1} parent=1 // pred_check_branch
      %51 = sbr.rel (%p49) target = $region29
    $region28: #{sll_dense_forward.1} parent=1 // pred_region
      %52 = vst [vmem:[#allocation2] sm:$0xff] %v46
      %53 = vst [vmem:[#allocation2 + $0x8] sm:$0xff] %v47
    $region29: #{sll_dense_forward.1} parent=1 // pred_fallthru
      _
    %v54 = vld [vmem:[#allocation3] sm:$0xff]
    %v55 = vld [vmem:[#allocation3 + $0x8] sm:$0xff]
    %v56 = vld [vmem:[#allocation3 + $0x10] sm:$0xff]
    %v57 = vld [vmem:[#allocation3 + $0x18] sm:$0xff]
    %v58 = vld [vmem:[#allocation3 + $0x20] sm:$0xff]
    %v59 = vld [vmem:[#allocation3 + $0x28] sm:$0xff]
    %v60 = vld [vmem:[#allocation3 + $0x30] sm:$0xff]
    %v61 = vld [vmem:[#allocation3 + $0x38] sm:$0xff]
    %v62 = vld [vmem:[#allocation3 + $0x40] sm:$0xff]
    %v63 = vld [vmem:[#allocation3 + $0x48] sm:$0xff]
    %v64 = vld [vmem:[#allocation3 + $0x50] sm:$0xff]
    %v65 = vld [vmem:[#allocation3 + $0x58] sm:$0xff]
    %v66 = vld [vmem:[#allocation3 + $0x60] sm:$0xff]
    %v67 = vld [vmem:[#allocation3 + $0x68] sm:$0xff]
    %v68 = vld [vmem:[#allocation3 + $0x70] sm:$0xff]
    %v69 = vld [vmem:[#allocation3 + $0x78] sm:$0xff]
    %v70 = vld [vmem:[%s2] sm:$0x1]
    %v72 = vlaneseq
    %v73 = vshrl.u32 %v72, 7
    %v74 = vsub.s32 0, %v73
    %v75 = vrot.slane %v70, %v74
    %77 = vmatprep.subr.mxu0 0.0
    %78 = vmatpush1.msra.mxu0 %v54
    %79 = vmatprep.subr.mxu0 0.0
    %80 = vmatpush1.msra.mxu0 %v55
    %81 = vmatprep.subr.mxu0 0.0
    %82 = vmatpush1.msra.mxu0 %v56
    %83 = vmatprep.subr.mxu0 0.0
    %84 = vmatpush1.msra.mxu0 %v57
    %85 = vmatprep.subr.mxu0 0.0
    %86 = vmatpush1.msra.mxu0 %v58
    %87 = vmatprep.subr.mxu0 0.0
    %88 = vmatpush1.msra.mxu0 %v59
    %89 = vmatprep.subr.mxu0 0.0
    %90 = vmatpush1.msra.mxu0 %v60
    %91 = vmatprep.subr.mxu0 0.0
    %92 = vmatpush1.msra.mxu0 %v61
    %93 = vmatprep.subr.mxu0 0.0
    %94 = vmatpush1.msra.mxu0 %v62
    %95 = vmatprep.subr.mxu0 0.0
    %96 = vmatpush1.msra.mxu0 %v63
    %97 = vmatprep.subr.mxu0 0.0
    %98 = vmatpush1.msra.mxu0 %v64
    %99 = vmatprep.subr.mxu0 0.0
    %100 = vmatpush1.msra.mxu0 %v65
    %101 = vmatprep.subr.mxu0 0.0
    %102 = vmatpush1.msra.mxu0 %v66
    %103 = vmatprep.subr.mxu0 0.0
    %104 = vmatpush1.msra.mxu0 %v67
    %105 = vmatprep.subr.mxu0 0.0
    %106 = vmatpush1.msra.mxu0 %v68
    %107 = vmatprep.subr.mxu0 0.0
    %108 = vmatpush1.msra.mxu0 %v69
    %109 = vmatprep.subr.mxu0 0.0
    %110 = vmatpush1.msra.mxu0 0.0
    %111 = vmatprep.subr.mxu0 0.0
    %112 = vmatpush1.msra.mxu0 0.0
    %113 = vmatprep.subr.mxu0 0.0
    %114 = vmatpush1.msra.mxu0 0.0
    %115 = vmatprep.subr.mxu0 0.0
    %116 = vmatpush1.msra.mxu0 0.0
    %117 = vmatprep.subr.mxu0 0.0
    %118 = vmatpush1.msra.mxu0 0.0
    %119 = vmatprep.subr.mxu0 0.0
    %120 = vmatpush1.msra.mxu0 0.0
    %121 = vmatprep.subr.mxu0 0.0
    %122 = vmatpush1.msra.mxu0 0.0
    %123 = vmatprep.subr.mxu0 0.0
    %124 = vmatpush1.msra.mxu0 0.0
    %125 = vmatprep.subr.mxu0 0.0
    %126 = vmatpush1.msra.mxu0 0.0
    %127 = vmatprep.subr.mxu0 0.0
    %128 = vmatpush1.msra.mxu0 0.0
    %129 = vmatprep.subr.mxu0 0.0
    %130 = vmatpush1.msra.mxu0 0.0
    %131 = vmatprep.subr.mxu0 0.0
    %132 = vmatpush1.msra.mxu0 0.0
    %133 = vmatprep.subr.mxu0 0.0
    %134 = vmatpush1.msra.mxu0 0.0
    %135 = vmatprep.subr.mxu0 0.0
    %136 = vmatpush1.msra.mxu0 0.0
    %137 = vmatprep.subr.mxu0 0.0
    %138 = vmatpush1.msra.mxu0 0.0
    %139 = vmatprep.subr.mxu0 0.0
    %140 = vmatpush1.msra.mxu0 0.0
    %141 = vmatprep.mubr.f32.mxu0 0.0
    %142 = vmatmul.mubr.f32.gmra.mrb[0].mxu0 %v46
    %v143 = vpop.f32.mrb[0].mxu0
    %v144 = vadd.f32 %v75, %v143
    %v145 = vpop.f32.mrb[0].mxu0
    %146 = vmatprep.mubr.f32.mxu0 0.0
    %147 = vmatmul.mubr.f32.gmra.mrb[0].mxu0 %v47
    %v148 = vpop.f32.mrb[0].mxu0
    %v149 = vadd.f32 %v75, %v148
    %v150 = vpop.f32.mrb[0].mxu0
    %151 = vdwg.mxu0
    %v152 = vmax.f32 %v144, 0.0
    %v153 = vmax.f32 %v149, 0.0
    %v154 = vld [vmem:[#allocation2] sm:$0xff]
    %v155 = vld [vmem:[#allocation2 + $0x8] sm:$0xff]
    %v156 = vld [vmem:[#allocation6] sm:$0xff]
    %v157 = vld [vmem:[#allocation6 + $0x8] sm:$0xff]
    %v158 = vld [vmem:[#allocation6 + $0x10] sm:$0xff]
    %v159 = vld [vmem:[#allocation6 + $0x18] sm:$0xff]
    %v160 = vld [vmem:[#allocation6 + $0x20] sm:$0xff]
    %v161 = vld [vmem:[#allocation6 + $0x28] sm:$0xff]
    %v162 = vld [vmem:[#allocation6 + $0x30] sm:$0xff]
    %v163 = vld [vmem:[#allocation6 + $0x38] sm:$0xff]
    %v164 = vld [vmem:[#allocation6 + $0x40] sm:$0xff]
    %v165 = vld [vmem:[#allocation6 + $0x48] sm:$0xff]
    %v166 = vld [vmem:[#allocation6 + $0x50] sm:$0xff]
    %v167 = vld [vmem:[#allocation6 + $0x58] sm:$0xff]
    %v168 = vld [vmem:[#allocation6 + $0x60] sm:$0xff]
    %v169 = vld [vmem:[#allocation6 + $0x68] sm:$0xff]
    %v170 = vld [vmem:[#allocation6 + $0x70] sm:$0xff]
    %v171 = vld [vmem:[#allocation6 + $0x78] sm:$0xff]
    %172 = vmatprep.subr.mxu0 0.0
    %173 = vmatpush1.msra.mxu0 %v156
    %174 = vmatprep.subr.mxu0 0.0
    %175 = vmatpush1.msra.mxu0 %v157
    %176 = vmatprep.subr.mxu0 0.0
    %177 = vmatpush1.msra.mxu0 %v158
    %178 = vmatprep.subr.mxu0 0.0
    %179 = vmatpush1.msra.mxu0 %v159
    %180 = vmatprep.subr.mxu0 0.0
    %181 = vmatpush1.msra.mxu0 %v160
    %182 = vmatprep.subr.mxu0 0.0
    %183 = vmatpush1.msra.mxu0 %v161
    %184 = vmatprep.subr.mxu0 0.0
    %185 = vmatpush1.msra.mxu0 %v162
    %186 = vmatprep.subr.mxu0 0.0
    %187 = vmatpush1.msra.mxu0 %v163
    %188 = vmatprep.subr.mxu0 0.0
    %189 = vmatpush1.msra.mxu0 %v164
    %190 = vmatprep.subr.mxu0 0.0
    %191 = vmatpush1.msra.mxu0 %v165
    %192 = vmatprep.subr.mxu0 0.0
    %193 = vmatpush1.msra.mxu0 %v166
    %194 = vmatprep.subr.mxu0 0.0
    %195 = vmatpush1.msra.mxu0 %v167
    %196 = vmatprep.subr.mxu0 0.0
    %197 = vmatpush1.msra.mxu0 %v168
    %198 = vmatprep.subr.mxu0 0.0
    %199 = vmatpush1.msra.mxu0 %v169
    %200 = vmatprep.subr.mxu0 0.0
    %201 = vmatpush1.msra.mxu0 %v170
    %202 = vmatprep.subr.mxu0 0.0
    %203 = vmatpush1.msra.mxu0 %v171
    %204 = vmatprep.subr.mxu0 0.0
    %205 = vmatpush1.msra.mxu0 0.0
    %206 = vmatprep.subr.mxu0 0.0
    %207 = vmatpush1.msra.mxu0 0.0
    %208 = vmatprep.subr.mxu0 0.0
    %209 = vmatpush1.msra.mxu0 0.0
    %210 = vmatprep.subr.mxu0 0.0
    %211 = vmatpush1.msra.mxu0 0.0
    %212 = vmatprep.subr.mxu0 0.0
    %213 = vmatpush1.msra.mxu0 0.0
    %214 = vmatprep.subr.mxu0 0.0
    %215 = vmatpush1.msra.mxu0 0.0
    %216 = vmatprep.subr.mxu0 0.0
    %217 = vmatpush1.msra.mxu0 0.0
    %218 = vmatprep.subr.mxu0 0.0
    %219 = vmatpush1.msra.mxu0 0.0
    %220 = vmatprep.subr.mxu0 0.0
    %221 = vmatpush1.msra.mxu0 0.0
    %222 = vmatprep.subr.mxu0 0.0
    %223 = vmatpush1.msra.mxu0 0.0
    %224 = vmatprep.subr.mxu0 0.0
    %225 = vmatpush1.msra.mxu0 0.0
    %226 = vmatprep.subr.mxu0 0.0
    %227 = vmatpush1.msra.mxu0 0.0
    %228 = vmatprep.subr.mxu0 0.0
    %229 = vmatpush1.msra.mxu0 0.0
    %230 = vmatprep.subr.mxu0 0.0
    %231 = vmatpush1.msra.mxu0 0.0
    %232 = vmatprep.subr.mxu0 0.0
    %233 = vmatpush1.msra.mxu0 0.0
    %234 = vmatprep.subr.mxu0 0.0
    %235 = vmatpush1.msra.mxu0 0.0
    %236 = vmatprep.mubr.f32.mxu0 0.0
    %237 = vmatmul.mubr.f32.gmra.mrb[0].mxu0 %v152
    %v238 = vpop.f32.mrb[0].mxu0
    %v239 = vadd.f32 0.0, %v238
    %v240 = vpop.f32.mrb[0].mxu0
    %241 = vmatprep.mubr.f32.mxu0 0.0
    %242 = vmatmul.mubr.f32.gmra.mrb[0].mxu0 %v153
    %v243 = vpop.f32.mrb[0].mxu0
    %v244 = vadd.f32 0.0, %v243
    %v245 = vpop.f32.mrb[0].mxu0
    %246 = vdwg.mxu0
    %v247 = vadd.f32 %v154, %v239
    %v248 = vadd.f32 %v155, %v244
    %249 = vst [vmem:[#allocation2] sm:$0xff] %v247
    %250 = vst [vmem:[#allocation2 + $0x8] sm:$0xff] %v248
    // Predicated region
    $region30: #{sll_dense_forward.1} parent=1 // pred_check
      %p251 = pneg %p48
    $region31: #{sll_dense_forward.1} parent=1 // pred_check_branch
      %253 = sbr.rel (%p251) target = $region33
    $region32: #{sll_dense_forward.1} parent=1 // pred_region
      %v254 = vld [vmem:[#allocation2] sm:$0xff]
      %v255 = vld [vmem:[#allocation2 + $0x8] sm:$0xff]
      %256 = vst [vmem:[#allocation8] sm:$0xff] %v254
      %257 = vst [vmem:[#allocation8 + $0x8] sm:$0xff] %v255
    $region33: #{sll_dense_forward.1} parent=1 // pred_fallthru
      _
    // Predicated region
    $region34: #{sll_dense_forward.1} parent=1 // pred_check
      _
    $region35: #{sll_dense_forward.1} parent=1 // pred_check_branch
      %259 = sbr.rel (0) target = $region37
    $region36: #{sll_dense_forward.1} parent=1 // pred_region
      %s261 = ssub.s32 256, 256
      %262 = vsyncadd [#allocation5], %s261
      %s263 = sshll.u32 [#allocation8], 4
      %s264 = int_to_ptr.vmem [resolvable:$true] %s263
      %269 = dma.vmem_to_hbm [thread:$0]  %s264, 256, %s4, [#allocation5], 128, 128, 8
    $region37: #{sll_dense_forward.1} parent=1 // pred_fallthru
      _
    // Predicated region
    $region38: #{sll_dense_forward.1} parent=1 // pred_check
      _
    $region39: #{sll_dense_forward.1} parent=1 // pred_check_branch
      %271 = sbr.rel (0) target = $region41
    $region40: #{sll_dense_forward.1} parent=1 // pred_region
      %272 = dma.done [#allocation5], 256
    $region41: #{sll_dense_forward.1} parent=1 // pred_fallthru
      _
    %273 = vsyncpa [#allocation4], 1
    %274 = vsyncpa [#allocation7], 1
    %275 = vsyncpa [#allocation5], 1

</llo_original>
